<compile_context>
chip_gen: v6e
topology: v6e:2x2x1
jax: 0.10.0
libtpu: 0.0.40
codegen_flags: <defaults>
</compile_context>

<pallas_src>
import jax
import jax.numpy as jnp
from jax.experimental import pallas as pl
from jax.experimental.pallas import tpu as pltpu

LANE = 128   # vreg lane width / MXU alignment
SUB = 8      # f32 sublane count
SUB_BF16 = 16  # bf16 min sublane tile


def _round_up(v, m):
    return ((v + m - 1) // m) * m


def _pad2(x, rows, cols, dtype):
    """Zero-pad a 2-D array to (rows, cols) and cast."""
    out = jnp.zeros((rows, cols), dtype)
    return out.at[: x.shape[0], : x.shape[1]].set(x.astype(dtype))


def gcn_single_kernel(xw0_ref, a_ref, p_ref, w_ref, b_ref, out_ref):
    """Fused 3-layer GCN + add-pool + 3-layer MLP head on lane-dense padded operands.

    xw0_ref: [Np, Dp] bf16  (X @ Wg0^T, precomputed in wrapper)
    a_ref:   [Np, Np] bf16  (dense adjacency, A[dst, src] = edge multiplicity)
    p_ref:   [Gp, Np] bf16  (pooling matrix, add pooling)
    w_ref:   [5, Dp, Dp] bf16  (Wg1^T, Wg2^T, Wf0^T, Wf1^T, Wf2^T -- all pre-transposed)
    b_ref:   [8, Dp] f32       (rows 0..2 = bf0, bf1, bf2)
    out_ref: [Gp, Dp] f32      (column 0 carries the real scalar output)
    """
    f32, bf16 = jnp.float32, jnp.bfloat16
    a = a_ref[...]

    # --- GCN layer 0: relu(A @ XW0) ---
    h = jnp.maximum(
        jnp.dot(a, xw0_ref[...], preferred_element_type=f32).astype(bf16), 0)

    # --- GCN layer 1: relu(A @ (h @ Wg1^T)) ---
    hw = jnp.dot(h, w_ref[0], preferred_element_type=f32).astype(bf16)
    h = jnp.maximum(jnp.dot(a, hw, preferred_element_type=f32).astype(bf16), 0)

    # --- GCN layer 2: relu(A @ (h @ Wg2^T)) ---
    hw = jnp.dot(h, w_ref[1], preferred_element_type=f32).astype(bf16)
    h = jnp.maximum(jnp.dot(a, hw, preferred_element_type=f32).astype(bf16), 0)

    # --- global_add_pool: cg = P @ h ---
    cg = jnp.dot(p_ref[...], h, preferred_element_type=f32)           # [Gp, Dp] f32

    # --- MLP head ---
    cg = jnp.maximum(
        (jnp.dot(cg.astype(bf16), w_ref[2], preferred_element_type=f32)
         + b_ref[0:1, :]).astype(bf16), 0)
    cg = jnp.maximum(
        (jnp.dot(cg, w_ref[3], preferred_element_type=f32)
         + b_ref[1:2, :]).astype(bf16), 0)
    out_ref[...] = (jnp.dot(cg, w_ref[4], preferred_element_type=f32)
                    + b_ref[2:3, :])


def gcn_single_forward(x, edge_index, batch, num_graphs, params):
    """x: [N, F0] node feats; edge_index: [2, E] (src, dst); batch: [N] graph ids."""
    (wg0, wg1, wg2, wf0, bf0, wf1, bf1, wf2, bf2) = params
    N, _ = x.shape
    G = num_graphs
    DIM = wg0.shape[0]

    Np = _round_up(N, LANE)
    Dp = _round_up(DIM, LANE)
    Gp = _round_up(G, SUB_BF16)      # bf16 min sublane tile is 16

    bf16, f32 = jnp.bfloat16, jnp.float32

    # Layer-0 feature transform at the true (tiny) size, in f32 (original torch
    # contraction order), then padded/cast once.
    xw0 = x @ wg0.T                                                    # [N, DIM] f32
    xw0_p = _pad2(xw0, Np, Dp, bf16)

    # Dense adjacency ('add' aggregation) and pooling matrix ('add' pooling) built
    # directly in padded bf16 -- plain-JAX glue, no f32 materialization + pad copy.
    src, dst = edge_index[0], edge_index[1]
    a_p = jnp.zeros((Np, Np), bf16).at[dst, src].add(1.0)
    p_p = jnp.zeros((Gp, Np), bf16).at[batch, jnp.arange(N)].set(1.0)
    # TODO(synk): for pooling='mean', scale each row of p_p by 1/nodes_per_graph.

    # Stack weights (pre-transposed so the kernel does plain [M,K]@[K,N]) and biases.
    w_all = jnp.stack([
        _pad2(wg1.T, Dp, Dp, bf16),
        _pad2(wg2.T, Dp, Dp, bf16),
        _pad2(wf0.T, Dp, Dp, bf16),
        _pad2(wf1.T, Dp, Dp, bf16),
        _pad2(wf2.T, Dp, Dp, bf16),   # Linear(dim, 1): only column 0 is real
    ])
    b_all = jnp.zeros((SUB, Dp), f32)
    b_all = b_all.at[0, :DIM].set(bf0)
    b_all = b_all.at[1, :DIM].set(bf1)
    b_all = b_all.at[2, :1].set(bf2)

    flops = 2 * (Np * Np * Dp                     # layer 0
                 + 2 * (Np * Dp * Dp + Np * Np * Dp)   # layers 1-2
                 + Gp * Np * Dp                   # pooling
                 + 3 * Gp * Dp * Dp)              # MLP head
    bytes_accessed = (2 * (Np * Dp + Np * Np + Gp * Np + 5 * Dp * Dp)  # bf16 operands
                      + 4 * SUB * Dp                                   # f32 biases
                      + 4 * Gp * Dp)                                   # f32 output

    vmem = pl.BlockSpec(memory_space=pltpu.MemorySpace.VMEM)
    out_padded = pl.pallas_call(
        gcn_single_kernel,
        out_shape=jax.ShapeDtypeStruct((Gp, Dp), f32),
        in_specs=[vmem] * 5,
        out_specs=vmem,
        cost_estimate=pl.CostEstimate(
            flops=int(flops), transcendentals=0, bytes_accessed=int(bytes_accessed)),
    )(xw0_p, a_p, p_p, w_all, b_all)

    return out_padded[:G, :1]


def make_params(key, num_node_feats, dim):
    """Deterministic parameter init (shapes match the torch module, n_layers=3)."""
    ks = jax.random.split(key, 9)

    def lin_w(k, out_c, in_c):
        bound = 1.0 / jnp.sqrt(jnp.float32(in_c))
        return jax.random.uniform(k, (out_c, in_c), jnp.float32, -bound, bound)

    def lin_b(k, out_c, in_c):
        bound = 1.0 / jnp.sqrt(jnp.float32(in_c))
        return jax.random.uniform(k, (out_c,), jnp.float32, -bound, bound)

    wg0 = lin_w(ks[0], dim, num_node_feats)   # GCNConv(num_node_feats, dim), bias=False
    wg1 = lin_w(ks[1], dim, dim)              # GCNConv(dim, dim)
    wg2 = lin_w(ks[2], dim, dim)              # GCNConv(dim, dim)
    wf0 = lin_w(ks[3], dim, dim)              # Linear(dim, dim)
    bf0 = lin_b(ks[4], dim, dim)
    wf1 = lin_w(ks[5], dim, dim)              # Linear(dim, dim)
    bf1 = lin_b(ks[6], dim, dim)
    wf2 = lin_w(ks[7], 1, dim)                # Linear(dim, 1)
    bf2 = lin_b(ks[8], 1, dim)
    return (wg0, wg1, wg2, wf0, bf0, wf1, bf1, wf2, bf2)


def reference_forward(x, a, p, params):
    """Pure-JAX f32 reference (matches the torch forward semantics)."""
    (wg0, wg1, wg2, wf0, bf0, wf1, bf1, wf2, bf2) = params
    h = jnp.maximum(a @ (x @ wg0.T), 0.0)
    h = jnp.maximum(a @ (h @ wg1.T), 0.0)
    h = jnp.maximum(a @ (h @ wg2.T), 0.0)
    cg = p @ h
    cg = jnp.maximum(cg @ wf0.T + bf0, 0.0)
    cg = jnp.maximum(cg @ wf1.T + bf1, 0.0)
    return cg @ wf2.T + bf2


if __name__ == "__main__":
    # Small synthetic graph batch: 2 graphs, 8 nodes each, 4 input node features,
    # hidden dim 32, n_layers=3, aggregation='add', pooling='add'.
    N, F0, DIM, G, E = 16, 4, 32, 2, 40

    key = jax.random.PRNGKey(0)
    k_x, k_src, k_dst, k_params = jax.random.split(key, 4)

    x = jax.random.normal(k_x, (N, F0), jnp.float32)

    # edge_index: keep edges within each graph (nodes 0-7 -> graph 0, 8-15 -> graph 1)
    half = E // 2
    src0 = jax.random.randint(k_src, (half,), 0, N // 2)
    dst0 = jax.random.randint(k_dst, (half,), 0, N // 2)
    src1 = jax.random.randint(k_src, (E - half,), N // 2, N)
    dst1 = jax.random.randint(k_dst, (E - half,), N // 2, N)
    src = jnp.concatenate([src0, src1])
    dst = jnp.concatenate([dst0, dst1])
    edge_index = jnp.stack([src, dst])                         # [2, E]

    # batch vector (graph id per node)
    batch = jnp.concatenate([jnp.zeros(N // 2, jnp.int32), jnp.ones(N // 2, jnp.int32)])

    params = make_params(k_params, F0, DIM)

    out = gcn_single_forward(x, edge_index, batch, G, params)
    jax.block_until_ready(out)
    assert out.shape == (G, 1)

    # Sanity-check against an f32 reference (bf16 matmuls -> relaxed tolerance).
    a_ref = jnp.zeros((N, N), jnp.float32).at[dst, src].add(1.0)
    p_ref = jax.nn.one_hot(batch, G, dtype=jnp.float32).T      # [G, N]
    ref = reference_forward(x, a_ref, p_ref, params)
    rel_err = float(jnp.max(jnp.abs(out - ref)) / (jnp.max(jnp.abs(ref)) + 1e-6))
    assert rel_err < 5e-2, f"kernel/reference mismatch: rel_err={rel_err}"

    print("KERNEL_OK")
</pallas_src>

<mosaic_0001>
module attributes {stable_mosaic.version = 11 : i64} {
  func.func @gcn_single_kernel(%arg0: memref<128x128xbf16, #tpu.memory_space<vmem>>, %arg1: memref<128x128xbf16, #tpu.memory_space<vmem>>, %arg2: memref<16x128xbf16, #tpu.memory_space<vmem>>, %arg3: memref<5x128x128xbf16, #tpu.memory_space<vmem>>, %arg4: memref<8x128xf32, #tpu.memory_space<vmem>>, %arg5: memref<16x128xf32, #tpu.memory_space<vmem>>) attributes {dimension_semantics = [], scalar_prefetch = 0 : i64, scratch_operands = 0 : i64, tpu.core_type = #tpu.core_type<tc>} {
    %c0 = arith.constant 0 : index
    %c0_0 = arith.constant 0 : index
    %0 = vector.load %arg1[%c0, %c0_0] : memref<128x128xbf16, #tpu.memory_space<vmem>>, vector<128x128xbf16>
    %c0_1 = arith.constant 0 : index
    %c0_2 = arith.constant 0 : index
    %1 = vector.load %arg0[%c0_1, %c0_2] : memref<128x128xbf16, #tpu.memory_space<vmem>>, vector<128x128xbf16>
    %cst = arith.constant dense<0.000000e+00> : vector<128x128xf32>
    %2 = tpu.matmul %0, %1, %cst {dimension_numbers = #tpu.dot_dimension_numbers<[1], [0], [0], [1], [0, 0, 1, 1], [], []>} : vector<128x128xbf16>, vector<128x128xbf16>, vector<128x128xf32> -> vector<128x128xf32>
    %3 = arith.truncf %2 : vector<128x128xf32> to vector<128x128xbf16>
    %cst_3 = arith.constant 0.000000e+00 : bf16
    %4 = vector.broadcast %cst_3 : bf16 to vector<128x128xbf16>
    %5 = arith.maximumf %3, %4 : vector<128x128xbf16>
    %c0_4 = arith.constant 0 : index
    %c0_5 = arith.constant 0 : index
    %c0_6 = arith.constant 0 : index
    %6 = vector.load %arg3[%c0_4, %c0_5, %c0_6] : memref<5x128x128xbf16, #tpu.memory_space<vmem>>, vector<1x128x128xbf16>
    %7 = vector.shape_cast %6 : vector<1x128x128xbf16> to vector<128x128xbf16>
    %cst_7 = arith.constant dense<0.000000e+00> : vector<128x128xf32>
    %8 = tpu.matmul %5, %7, %cst_7 {dimension_numbers = #tpu.dot_dimension_numbers<[1], [0], [0], [1], [0, 0, 1, 1], [], []>} : vector<128x128xbf16>, vector<128x128xbf16>, vector<128x128xf32> -> vector<128x128xf32>
    %9 = arith.truncf %8 : vector<128x128xf32> to vector<128x128xbf16>
    %cst_8 = arith.constant dense<0.000000e+00> : vector<128x128xf32>
    %10 = tpu.matmul %0, %9, %cst_8 {dimension_numbers = #tpu.dot_dimension_numbers<[1], [0], [0], [1], [0, 0, 1, 1], [], []>} : vector<128x128xbf16>, vector<128x128xbf16>, vector<128x128xf32> -> vector<128x128xf32>
    %11 = arith.truncf %10 : vector<128x128xf32> to vector<128x128xbf16>
    %cst_9 = arith.constant 0.000000e+00 : bf16
    %12 = vector.broadcast %cst_9 : bf16 to vector<128x128xbf16>
    %13 = arith.maximumf %11, %12 : vector<128x128xbf16>
    %c1 = arith.constant 1 : index
    %c0_10 = arith.constant 0 : index
    %c0_11 = arith.constant 0 : index
    %14 = vector.load %arg3[%c1, %c0_10, %c0_11] : memref<5x128x128xbf16, #tpu.memory_space<vmem>>, vector<1x128x128xbf16>
    %15 = vector.shape_cast %14 : vector<1x128x128xbf16> to vector<128x128xbf16>
    %cst_12 = arith.constant dense<0.000000e+00> : vector<128x128xf32>
    %16 = tpu.matmul %13, %15, %cst_12 {dimension_numbers = #tpu.dot_dimension_numbers<[1], [0], [0], [1], [0, 0, 1, 1], [], []>} : vector<128x128xbf16>, vector<128x128xbf16>, vector<128x128xf32> -> vector<128x128xf32>
    %17 = arith.truncf %16 : vector<128x128xf32> to vector<128x128xbf16>
    %cst_13 = arith.constant dense<0.000000e+00> : vector<128x128xf32>
    %18 = tpu.matmul %0, %17, %cst_13 {dimension_numbers = #tpu.dot_dimension_numbers<[1], [0], [0], [1], [0, 0, 1, 1], [], []>} : vector<128x128xbf16>, vector<128x128xbf16>, vector<128x128xf32> -> vector<128x128xf32>
    %19 = arith.truncf %18 : vector<128x128xf32> to vector<128x128xbf16>
    %cst_14 = arith.constant 0.000000e+00 : bf16
    %20 = vector.broadcast %cst_14 : bf16 to vector<128x128xbf16>
    %21 = arith.maximumf %19, %20 : vector<128x128xbf16>
    %c0_15 = arith.constant 0 : index
    %c0_16 = arith.constant 0 : index
    %22 = vector.load %arg2[%c0_15, %c0_16] : memref<16x128xbf16, #tpu.memory_space<vmem>>, vector<16x128xbf16>
    %cst_17 = arith.constant dense<0.000000e+00> : vector<16x128xf32>
    %23 = tpu.matmul %22, %21, %cst_17 {dimension_numbers = #tpu.dot_dimension_numbers<[1], [0], [0], [1], [0, 0, 1, 1], [], []>} : vector<16x128xbf16>, vector<128x128xbf16>, vector<16x128xf32> -> vector<16x128xf32>
    %24 = arith.truncf %23 : vector<16x128xf32> to vector<16x128xbf16>
    %c2 = arith.constant 2 : index
    %c0_18 = arith.constant 0 : index
    %c0_19 = arith.constant 0 : index
    %25 = vector.load %arg3[%c2, %c0_18, %c0_19] : memref<5x128x128xbf16, #tpu.memory_space<vmem>>, vector<1x128x128xbf16>
    %26 = vector.shape_cast %25 : vector<1x128x128xbf16> to vector<128x128xbf16>
    %cst_20 = arith.constant dense<0.000000e+00> : vector<16x128xf32>
    %27 = tpu.matmul %24, %26, %cst_20 {dimension_numbers = #tpu.dot_dimension_numbers<[1], [0], [0], [1], [0, 0, 1, 1], [], []>} : vector<16x128xbf16>, vector<128x128xbf16>, vector<16x128xf32> -> vector<16x128xf32>
    %c0_21 = arith.constant 0 : index
    %c0_22 = arith.constant 0 : index
    %28 = vector.load %arg4[%c0_21, %c0_22] : memref<8x128xf32, #tpu.memory_space<vmem>>, vector<1x128xf32>
    %29 = vector.broadcast %28 : vector<1x128xf32> to vector<16x128xf32>
    %30 = arith.addf %27, %29 : vector<16x128xf32>
    %31 = arith.truncf %30 : vector<16x128xf32> to vector<16x128xbf16>
    %cst_23 = arith.constant 0.000000e+00 : bf16
    %32 = vector.broadcast %cst_23 : bf16 to vector<16x128xbf16>
    %33 = arith.maximumf %31, %32 : vector<16x128xbf16>
    %c3 = arith.constant 3 : index
    %c0_24 = arith.constant 0 : index
    %c0_25 = arith.constant 0 : index
    %34 = vector.load %arg3[%c3, %c0_24, %c0_25] : memref<5x128x128xbf16, #tpu.memory_space<vmem>>, vector<1x128x128xbf16>
    %35 = vector.shape_cast %34 : vector<1x128x128xbf16> to vector<128x128xbf16>
    %cst_26 = arith.constant dense<0.000000e+00> : vector<16x128xf32>
    %36 = tpu.matmul %33, %35, %cst_26 {dimension_numbers = #tpu.dot_dimension_numbers<[1], [0], [0], [1], [0, 0, 1, 1], [], []>} : vector<16x128xbf16>, vector<128x128xbf16>, vector<16x128xf32> -> vector<16x128xf32>
    %c1_27 = arith.constant 1 : index
    %c0_28 = arith.constant 0 : index
    %37 = vector.load %arg4[%c1_27, %c0_28] : memref<8x128xf32, #tpu.memory_space<vmem>>, vector<1x128xf32>
    %38 = vector.broadcast %37 : vector<1x128xf32> to vector<16x128xf32>
    %39 = arith.addf %36, %38 : vector<16x128xf32>
    %40 = arith.truncf %39 : vector<16x128xf32> to vector<16x128xbf16>
    %cst_29 = arith.constant 0.000000e+00 : bf16
    %41 = vector.broadcast %cst_29 : bf16 to vector<16x128xbf16>
    %42 = arith.maximumf %40, %41 : vector<16x128xbf16>
    %c4 = arith.constant 4 : index
    %c0_30 = arith.constant 0 : index
    %c0_31 = arith.constant 0 : index
    %43 = vector.load %arg3[%c4, %c0_30, %c0_31] : memref<5x128x128xbf16, #tpu.memory_space<vmem>>, vector<1x128x128xbf16>
    %44 = vector.shape_cast %43 : vector<1x128x128xbf16> to vector<128x128xbf16>
    %cst_32 = arith.constant dense<0.000000e+00> : vector<16x128xf32>
    %45 = tpu.matmul %42, %44, %cst_32 {dimension_numbers = #tpu.dot_dimension_numbers<[1], [0], [0], [1], [0, 0, 1, 1], [], []>} : vector<16x128xbf16>, vector<128x128xbf16>, vector<16x128xf32> -> vector<16x128xf32>
    %c2_33 = arith.constant 2 : index
    %c0_34 = arith.constant 0 : index
    %46 = vector.load %arg4[%c2_33, %c0_34] : memref<8x128xf32, #tpu.memory_space<vmem>>, vector<1x128xf32>
    %47 = vector.broadcast %46 : vector<1x128xf32> to vector<16x128xf32>
    %48 = arith.addf %45, %47 : vector<16x128xf32>
    %c0_35 = arith.constant 0 : index
    %c0_36 = arith.constant 0 : index
    %49 = vector.load %arg5[%c0_35, %c0_36] : memref<16x128xf32, #tpu.memory_space<vmem>>, vector<16x128xf32>
    tpu.vector_store %arg5[%c0_35, %c0_36], %48 {strides = array<i32>} : memref<16x128xf32, #tpu.memory_space<vmem>>, vector<16x128xf32>,
    return
  }
}

</mosaic_0001>

<llo_original>
// kernel: tpu_custom_call.1
$region0: #{tpu_custom_call.1}
  #allocation0 [shape = 'u32[]', space=smem, size = 0x4, offset = 0x4, fixed_abs, tag = 'smem constant byte address 0x4 - core index']
  #allocation1 [shape = 'u32[144,128]{1,0:T(1,128)}', space=vmem, size = 0x12000, scoped, tag = 'internal scratch']
  %s0 = inlined_call_operand.hbm [shape: bf16[128,128], index: 0, kind: input, shape index: {}]
  %s1 = inlined_call_operand.hbm [shape: bf16[128,128], index: 1, kind: input, shape index: {}]
  %s2 = inlined_call_operand.hbm [shape: bf16[16,128], index: 2, kind: input, shape index: {}]
  %s3 = inlined_call_operand.hbm [shape: bf16[5,128,128], index: 3, kind: input, shape index: {}]
  %s4 = inlined_call_operand.hbm [shape: f32[8,128], index: 4, kind: input, shape index: {}]
  %s5 = inlined_call_operand.hbm [shape: f32[16,128], index: 5, kind: output, shape index: {}]
  %s6 = sld [smem:[#allocation0]]
  $region50: #{tpu_custom_call.1} parent=0
    _
  %s8 = ssub.s32 1, %s6
  %s9 = scalar_select 0, %s8, %s6
  $region1: #{tpu_custom_call.1} parent=0
    #allocation2 [shape = 'u8[32768]{0}', space=vmem, size = 0x8000, scoped, tag = 'input window, operand 0, single buffered']
    #allocation3 [shape = 's32[1]{0}', space=sflag, size = 0x4, scoped, tag = 'scoped memory for tpu_custom_call.1']
    #allocation4 [shape = 's32[1]{0}', space=sflag, size = 0x4, scoped, tag = 'scoped memory for tpu_custom_call.1']
    #allocation5 [shape = 'u8[32768]{0}', space=vmem, size = 0x8000, scoped, tag = 'input window, operand 1, single buffered']
    #allocation6 [shape = 's32[1]{0}', space=sflag, size = 0x4, scoped, tag = 'scoped memory for tpu_custom_call.1']
    #allocation7 [shape = 'u8[4096]{0}', space=vmem, size = 0x1000, scoped, tag = 'input window, operand 2, single buffered']
    #allocation8 [shape = 'u8[163840]{0}', space=vmem, size = 0x28000, scoped, tag = 'input window, operand 3, single buffered']
    #allocation9 [shape = 's32[1]{0}', space=sflag, size = 0x4, scoped, tag = 'scoped memory for tpu_custom_call.1']
    #allocation10 [shape = 'u8[4096]{0}', space=vmem, size = 0x1000, scoped, tag = 'input window, operand 4, single buffered']
    #allocation11 [shape = 'u8[8192]{0}', space=vmem, size = 0x2000, scoped, tag = 'output window, operand 0, single buffered']
    %10 = vsyncpa [#allocation3], 0
    %11 = vsyncpa [#allocation6], 0
    %12 = vsyncpa [#allocation9], 0
    %13 = vsyncpa [#allocation4], 0
    // Predicated region
    $region2: #{tpu_custom_call.1} parent=1 // pred_check
      _
    $region3: #{tpu_custom_call.1} parent=1 // pred_check_branch
      %15 = sbr.rel (0) target = $region5
    $region4: #{tpu_custom_call.1} parent=1 // pred_region
      %s17 = ssub.s32 1024, 1024
      %18 = vsyncadd [#allocation3], %s17
      %s19 = sshll.u32 [#allocation2], 4
      %s20 = int_to_ptr.vmem [resolvable:$true] %s19
      %25 = dma.hbm_to_vmem [thread:$0]  %s0, 1024, %s20, [#allocation3], 64, 64, 4
    $region5: #{tpu_custom_call.1} parent=1 // pred_fallthru
      _
    // Predicated region
    $region6: #{tpu_custom_call.1} parent=1 // pred_check
      _
    $region7: #{tpu_custom_call.1} parent=1 // pred_check_branch
      %27 = sbr.rel (0) target = $region9
    $region8: #{tpu_custom_call.1} parent=1 // pred_region
      %s29 = ssub.s32 1024, 1024
      %30 = vsyncadd [#allocation6], %s29
      %s31 = sshll.u32 [#allocation5], 4
      %s32 = int_to_ptr.vmem [resolvable:$true] %s31
      %37 = dma.hbm_to_vmem [thread:$0]  %s1, 1024, %s32, [#allocation6], 64, 64, 4
    $region9: #{tpu_custom_call.1} parent=1 // pred_fallthru
      _
    // Predicated region
    $region10: #{tpu_custom_call.1} parent=1 // pred_check
      _
    $region11: #{tpu_custom_call.1} parent=1 // pred_check_branch
      %39 = sbr.rel (0) target = $region13
    $region12: #{tpu_custom_call.1} parent=1 // pred_region
      %s41 = ssub.s32 128, 128
      %42 = vsyncadd [#allocation6], %s41
      %s43 = sshll.u32 [#allocation7], 4
      %s44 = int_to_ptr.vmem [resolvable:$true] %s43
      %49 = dma.hbm_to_vmem [thread:$0]  %s2, 128, %s44, [#allocation6], 64, 64, 4
    $region13: #{tpu_custom_call.1} parent=1 // pred_fallthru
      _
    // Predicated region
    $region14: #{tpu_custom_call.1} parent=1 // pred_check
      _
    $region15: #{tpu_custom_call.1} parent=1 // pred_check_branch
      %51 = sbr.rel (0) target = $region17
    $region16: #{tpu_custom_call.1} parent=1 // pred_region
      %s53 = ssub.s32 5120, 5120
      %54 = vsyncadd [#allocation9], %s53
      %s55 = sshll.u32 [#allocation8], 4
      %s56 = int_to_ptr.vmem [resolvable:$true] %s55
      %61 = dma.hbm_to_vmem [thread:$0]  %s3, 5120, %s56, [#allocation9], 64, 64, 4
    $region17: #{tpu_custom_call.1} parent=1 // pred_fallthru
      _
    // Predicated region
    $region18: #{tpu_custom_call.1} parent=1 // pred_check
      _
    $region19: #{tpu_custom_call.1} parent=1 // pred_check_branch
      %63 = sbr.rel (0) target = $region21
    $region20: #{tpu_custom_call.1} parent=1 // pred_region
      %s65 = ssub.s32 128, 128
      %66 = vsyncadd [#allocation9], %s65
      %s68 = sshll.u32 [#allocation10], 4
      %s69 = int_to_ptr.vmem [resolvable:$true] %s68
      %71 = dma.hbm_to_vmem [thread:$0]  %s4, 128, %s69, [#allocation9]
    $region21: #{tpu_custom_call.1} parent=1 // pred_fallthru
      _
    // Predicated region
    $region22: #{tpu_custom_call.1} parent=1 // pred_check
      _
    $region23: #{tpu_custom_call.1} parent=1 // pred_check_branch
      %73 = sbr.rel (0) target = $region25
    $region24: #{tpu_custom_call.1} parent=1 // pred_region
      %74 = dma.done [#allocation3], 1024
    $region25: #{tpu_custom_call.1} parent=1 // pred_fallthru
      _
    // Predicated region
    $region26: #{tpu_custom_call.1} parent=1 // pred_check
      _
    $region27: #{tpu_custom_call.1} parent=1 // pred_check_branch
      %76 = sbr.rel (0) target = $region29
    $region28: #{tpu_custom_call.1} parent=1 // pred_region
      %77 = dma.done [#allocation6], 1024
    $region29: #{tpu_custom_call.1} parent=1 // pred_fallthru
      _
    // Predicated region
    $region30: #{tpu_custom_call.1} parent=1 // pred_check
      _
    $region31: #{tpu_custom_call.1} parent=1 // pred_check_branch
      %79 = sbr.rel (0) target = $region33
    $region32: #{tpu_custom_call.1} parent=1 // pred_region
      %80 = dma.done [#allocation6], 128
    $region33: #{tpu_custom_call.1} parent=1 // pred_fallthru
      _
    // Predicated region
    $region34: #{tpu_custom_call.1} parent=1 // pred_check
      _
    $region35: #{tpu_custom_call.1} parent=1 // pred_check_branch
      %82 = sbr.rel (0) target = $region37
    $region36: #{tpu_custom_call.1} parent=1 // pred_region
      %83 = dma.done [#allocation9], 5120
    $region37: #{tpu_custom_call.1} parent=1 // pred_fallthru
      _
    // Predicated region
    $region38: #{tpu_custom_call.1} parent=1 // pred_check
      _
    $region39: #{tpu_custom_call.1} parent=1 // pred_check_branch
      %85 = sbr.rel (0) target = $region41
    $region40: #{tpu_custom_call.1} parent=1 // pred_region
      %86 = dma.done [#allocation9], 128
    $region41: #{tpu_custom_call.1} parent=1 // pred_fallthru
      _
    %v88 = vld [vmem:[#allocation5] sm:$0xf]
    %v89 = vld [vmem:[#allocation5 + $0x4] sm:$0xf]
    %v90 = vld [vmem:[#allocation5 + $0x8] sm:$0xf]
    %v91 = vld [vmem:[#allocation5 + $0xc] sm:$0xf]
    %v92 = vld [vmem:[#allocation5 + $0x10] sm:$0xf]
    %v93 = vld [vmem:[#allocation5 + $0x14] sm:$0xf]
    %v94 = vld [vmem:[#allocation5 + $0x18] sm:$0xf]
    %v95 = vld [vmem:[#allocation5 + $0x1c] sm:$0xf]
    %v96 = vld [vmem:[#allocation5 + $0x20] sm:$0xf]
    %v97 = vld [vmem:[#allocation5 + $0x24] sm:$0xf]
    %v98 = vld [vmem:[#allocation5 + $0x28] sm:$0xf]
    %v99 = vld [vmem:[#allocation5 + $0x2c] sm:$0xf]
    %v100 = vld [vmem:[#allocation5 + $0x30] sm:$0xf]
    %v101 = vld [vmem:[#allocation5 + $0x34] sm:$0xf]
    %v102 = vld [vmem:[#allocation5 + $0x38] sm:$0xf]
    %v103 = vld [vmem:[#allocation5 + $0x3c] sm:$0xf]
    %v104 = vld [vmem:[#allocation2] sm:$0xf]
    %v105 = vld [vmem:[#allocation2 + $0x4] sm:$0xf]
    %v106 = vld [vmem:[#allocation2 + $0x8] sm:$0xf]
    %v107 = vld [vmem:[#allocation2 + $0xc] sm:$0xf]
    %v108 = vld [vmem:[#allocation2 + $0x10] sm:$0xf]
    %v109 = vld [vmem:[#allocation2 + $0x14] sm:$0xf]
    %v110 = vld [vmem:[#allocation2 + $0x18] sm:$0xf]
    %v111 = vld [vmem:[#allocation2 + $0x1c] sm:$0xf]
    %v112 = vld [vmem:[#allocation2 + $0x20] sm:$0xf]
    %v113 = vld [vmem:[#allocation2 + $0x24] sm:$0xf]
    %v114 = vld [vmem:[#allocation2 + $0x28] sm:$0xf]
    %v115 = vld [vmem:[#allocation2 + $0x2c] sm:$0xf]
    %v116 = vld [vmem:[#allocation2 + $0x30] sm:$0xf]
    %v117 = vld [vmem:[#allocation2 + $0x34] sm:$0xf]
    %v118 = vld [vmem:[#allocation2 + $0x38] sm:$0xf]
    %v119 = vld [vmem:[#allocation2 + $0x3c] sm:$0xf]
    %v136 = vunpack.c.l.b16 %v88
    %v137 = vunpack.c.l.b16 %v89
    %v138 = vunpack.c.l.b16 %v90
    %v139 = vunpack.c.l.b16 %v91
    %v140 = vunpack.c.l.b16 %v92
    %v141 = vunpack.c.l.b16 %v93
    %v142 = vunpack.c.l.b16 %v94
    %v143 = vunpack.c.l.b16 %v95
    %v144 = vunpack.c.l.b16 %v96
    %v145 = vunpack.c.l.b16 %v97
    %v146 = vunpack.c.l.b16 %v98
    %v147 = vunpack.c.l.b16 %v99
    %v148 = vunpack.c.l.b16 %v100
    %v149 = vunpack.c.l.b16 %v101
    %v150 = vunpack.c.l.b16 %v102
    %v151 = vunpack.c.l.b16 %v103
    %v152 = vpack.c.b16 %v137, %v136
    %v153 = vpack.c.b16 %v139, %v138
    %v154 = vpack.c.b16 %v141, %v140
    %v155 = vpack.c.b16 %v143, %v142
    %v156 = vpack.c.b16 %v145, %v144
    %v157 = vpack.c.b16 %v147, %v146
    %v158 = vpack.c.b16 %v149, %v148
    %v159 = vpack.c.b16 %v151, %v150
    %v184 = vunpack.c.l.b16 %v104
    %v185 = vunpack.c.l.b16 %v105
    %v186 = vunpack.c.l.b16 %v106
    %v187 = vunpack.c.l.b16 %v107
    %v188 = vunpack.c.l.b16 %v108
    %v189 = vunpack.c.l.b16 %v109
    %v190 = vunpack.c.l.b16 %v110
    %v191 = vunpack.c.l.b16 %v111
    %v192 = vunpack.c.l.b16 %v112
    %v193 = vunpack.c.l.b16 %v113
    %v194 = vunpack.c.l.b16 %v114
    %v195 = vunpack.c.l.b16 %v115
    %v196 = vunpack.c.l.b16 %v116
    %v197 = vunpack.c.l.b16 %v117
    %v198 = vunpack.c.l.b16 %v118
    %v199 = vunpack.c.l.b16 %v119
    %v200 = vpack.c.b16 %v185, %v184
    %v201 = vpack.c.b16 %v187, %v186
    %v202 = vpack.c.b16 %v189, %v188
    %v203 = vpack.c.b16 %v191, %v190
    %v204 = vpack.c.b16 %v193, %v192
    %v205 = vpack.c.b16 %v195, %v194
    %v206 = vpack.c.b16 %v197, %v196
    %v207 = vpack.c.b16 %v199, %v198
    %216 = vmatprep.subr.bf16.mxu0 0
    %217 = vmatpush1.bf16.msra.mxu0 %v207
    %218 = vmatprep.subr.bf16.mxu0 0
    %219 = vmatpush1.bf16.msra.mxu0 %v206
    %220 = vmatprep.subr.bf16.mxu0 0
    %221 = vmatpush1.bf16.msra.mxu0 %v205
    %222 = vmatprep.subr.bf16.mxu0 0
    %223 = vmatpush1.bf16.msra.mxu0 %v204
    %224 = vmatprep.subr.bf16.mxu0 0
    %225 = vmatpush1.bf16.msra.mxu0 %v203
    %226 = vmatprep.subr.bf16.mxu0 0
    %227 = vmatpush1.bf16.msra.mxu0 %v202
    %228 = vmatprep.subr.bf16.mxu0 0
    %229 = vmatpush1.bf16.msra.mxu0 %v201
    %230 = vmatprep.subr.bf16.mxu0 0
    %231 = vmatpush1.bf16.msra.mxu0 %v200
    %232 = vmatprep.subr.bf16.mxu0 0
    %233 = vmatpush2.bf16.msra.mxu0 0
    %234 = vmatprep.subr.bf16.mxu0 0
    %235 = vmatpush2.bf16.msra.mxu0 0
    %236 = vmatprep.subr.bf16.mxu0 0
    %237 = vmatpush2.bf16.msra.mxu0 0
    %238 = vmatprep.subr.bf16.mxu0 0
    %239 = vmatpush2.bf16.msra.mxu0 0
    %240 = vmatprep.subr.bf16.mxu0 0
    %241 = vmatpush2.bf16.msra.mxu0 0
    %242 = vmatprep.subr.bf16.mxu0 0
    %243 = vmatpush2.bf16.msra.mxu0 0
    %244 = vmatprep.subr.bf16.mxu0 0
    %245 = vmatpush2.bf16.msra.mxu0 0
    %246 = vmatprep.subr.bf16.mxu0 0
    %247 = vmatpush2.bf16.msra.mxu0 0
    %248 = vmatprep.mubr.bf16.mxu0 0
    %249 = vmatmul.mubr.bf16.gmra.mxu0 %v152
    %v250 = vpop.f32.mrf.mxu0
    %v251 = vadd.f32 0.0, %v250
    %v252 = vpop.f32.mrf.mxu0
    %v253 = vpop.f32.mrf.mxu0
    %v254 = vadd.f32 0.0, %v253
    %v255 = vpop.f32.mrf.mxu0
    %256 = vmatprep.mubr.bf16.mxu0 0
    %257 = vmatmul.mubr.bf16.gmra.mxu0 %v153
    %v258 = vpop.f32.mrf.mxu0
    %v259 = vadd.f32 0.0, %v258
    %v260 = vpop.f32.mrf.mxu0
    %v261 = vpop.f32.mrf.mxu0
    %v262 = vadd.f32 0.0, %v261
    %v263 = vpop.f32.mrf.mxu0
    %264 = vmatprep.mubr.bf16.mxu0 0
    %265 = vmatmul.mubr.bf16.gmra.mxu0 %v154
    %v266 = vpop.f32.mrf.mxu0
    %v267 = vadd.f32 0.0, %v266
    %v268 = vpop.f32.mrf.mxu0
    %v269 = vpop.f32.mrf.mxu0
    %v270 = vadd.f32 0.0, %v269
    %v271 = vpop.f32.mrf.mxu0
    %272 = vmatprep.mubr.bf16.mxu0 0
    %273 = vmatmul.mubr.bf16.gmra.mxu0 %v155
    %v274 = vpop.f32.mrf.mxu0
    %v275 = vadd.f32 0.0, %v274
    %v276 = vpop.f32.mrf.mxu0
    %v277 = vpop.f32.mrf.mxu0
    %v278 = vadd.f32 0.0, %v277
    %v279 = vpop.f32.mrf.mxu0
    %280 = vmatprep.mubr.bf16.mxu0 0
    %281 = vmatmul.mubr.bf16.gmra.mxu0 %v156
    %v282 = vpop.f32.mrf.mxu0
    %v283 = vadd.f32 0.0, %v282
    %v284 = vpop.f32.mrf.mxu0
    %v285 = vpop.f32.mrf.mxu0
    %v286 = vadd.f32 0.0, %v285
    %v287 = vpop.f32.mrf.mxu0
    %288 = vmatprep.mubr.bf16.mxu0 0
    %289 = vmatmul.mubr.bf16.gmra.mxu0 %v157
    %v290 = vpop.f32.mrf.mxu0
    %v291 = vadd.f32 0.0, %v290
    %v292 = vpop.f32.mrf.mxu0
    %v293 = vpop.f32.mrf.mxu0
    %v294 = vadd.f32 0.0, %v293
    %v295 = vpop.f32.mrf.mxu0
    %296 = vmatprep.mubr.bf16.mxu0 0
    %297 = vmatmul.mubr.bf16.gmra.mxu0 %v158
    %v298 = vpop.f32.mrf.mxu0
    %v299 = vadd.f32 0.0, %v298
    %v300 = vpop.f32.mrf.mxu0
    %v301 = vpop.f32.mrf.mxu0
    %v302 = vadd.f32 0.0, %v301
    %v303 = vpop.f32.mrf.mxu0
    %304 = vmatprep.mubr.bf16.mxu0 0
    %305 = vmatmul.mubr.bf16.gmra.mxu0 %v159
    %v306 = vpop.f32.mrf.mxu0
    %v307 = vadd.f32 0.0, %v306
    %v308 = vpop.f32.mrf.mxu0
    %v309 = vpop.f32.mrf.mxu0
    %v310 = vadd.f32 0.0, %v309
    %v311 = vpop.f32.mrf.mxu0
    %312 = vdwg.mxu0
    %v313 = vpack.c.bf16 %v254, %v251
    %v314 = vpack.c.bf16 %v262, %v259
    %v315 = vpack.c.bf16 %v270, %v267
    %v316 = vpack.c.bf16 %v278, %v275
    %v317 = vpack.c.bf16 %v286, %v283
    %v318 = vpack.c.bf16 %v294, %v291
    %v319 = vpack.c.bf16 %v302, %v299
    %v320 = vpack.c.bf16 %v310, %v307
    %v321 = vmax.bf16 %v313, 0
    %v322 = vmax.bf16 %v314, 0
    %v323 = vmax.bf16 %v315, 0
    %v324 = vmax.bf16 %v316, 0
    %v325 = vmax.bf16 %v317, 0
    %v326 = vmax.bf16 %v318, 0
    %v327 = vmax.bf16 %v319, 0
    %v328 = vmax.bf16 %v320, 0
    %v329 = vld [vmem:[#allocation8] sm:$0xf]
    %v330 = vld [vmem:[#allocation8 + $0x4] sm:$0xf]
    %v331 = vld [vmem:[#allocation8 + $0x8] sm:$0xf]
    %v332 = vld [vmem:[#allocation8 + $0xc] sm:$0xf]
    %v333 = vld [vmem:[#allocation8 + $0x10] sm:$0xf]
    %v334 = vld [vmem:[#allocation8 + $0x14] sm:$0xf]
    %v335 = vld [vmem:[#allocation8 + $0x18] sm:$0xf]
    %v336 = vld [vmem:[#allocation8 + $0x1c] sm:$0xf]
    %v337 = vld [vmem:[#allocation8 + $0x20] sm:$0xf]
    %v338 = vld [vmem:[#allocation8 + $0x24] sm:$0xf]
    %v339 = vld [vmem:[#allocation8 + $0x28] sm:$0xf]
    %v340 = vld [vmem:[#allocation8 + $0x2c] sm:$0xf]
    %v341 = vld [vmem:[#allocation8 + $0x30] sm:$0xf]
    %v342 = vld [vmem:[#allocation8 + $0x34] sm:$0xf]
    %v343 = vld [vmem:[#allocation8 + $0x38] sm:$0xf]
    %v344 = vld [vmem:[#allocation8 + $0x3c] sm:$0xf]
    %v361 = vunpack.c.l.b16 %v329
    %v362 = vunpack.c.l.b16 %v330
    %v363 = vunpack.c.l.b16 %v331
    %v364 = vunpack.c.l.b16 %v332
    %v365 = vunpack.c.l.b16 %v333
    %v366 = vunpack.c.l.b16 %v334
    %v367 = vunpack.c.l.b16 %v335
    %v368 = vunpack.c.l.b16 %v336
    %v369 = vunpack.c.l.b16 %v337
    %v370 = vunpack.c.l.b16 %v338
    %v371 = vunpack.c.l.b16 %v339
    %v372 = vunpack.c.l.b16 %v340
    %v373 = vunpack.c.l.b16 %v341
    %v374 = vunpack.c.l.b16 %v342
    %v375 = vunpack.c.l.b16 %v343
    %v376 = vunpack.c.l.b16 %v344
    %v377 = vpack.c.b16 %v362, %v361
    %v378 = vpack.c.b16 %v364, %v363
    %v379 = vpack.c.b16 %v366, %v365
    %v380 = vpack.c.b16 %v368, %v367
    %v381 = vpack.c.b16 %v370, %v369
    %v382 = vpack.c.b16 %v372, %v371
    %v383 = vpack.c.b16 %v374, %v373
    %v384 = vpack.c.b16 %v376, %v375
    %393 = vmatprep.subr.bf16.mxu0 0
    %394 = vmatpush1.bf16.msra.mxu0 %v384
    %395 = vmatprep.subr.bf16.mxu0 0
    %396 = vmatpush1.bf16.msra.mxu0 %v383
    %397 = vmatprep.subr.bf16.mxu0 0
    %398 = vmatpush1.bf16.msra.mxu0 %v382
    %399 = vmatprep.subr.bf16.mxu0 0
    %400 = vmatpush1.bf16.msra.mxu0 %v381
    %401 = vmatprep.subr.bf16.mxu0 0
    %402 = vmatpush1.bf16.msra.mxu0 %v380
    %403 = vmatprep.subr.bf16.mxu0 0
    %404 = vmatpush1.bf16.msra.mxu0 %v379
    %405 = vmatprep.subr.bf16.mxu0 0
    %406 = vmatpush1.bf16.msra.mxu0 %v378
    %407 = vmatprep.subr.bf16.mxu0 0
    %408 = vmatpush1.bf16.msra.mxu0 %v377
    %409 = vmatprep.subr.bf16.mxu0 0
    %410 = vmatpush2.bf16.msra.mxu0 0
    %411 = vmatprep.subr.bf16.mxu0 0
    %412 = vmatpush2.bf16.msra.mxu0 0
    %413 = vmatprep.subr.bf16.mxu0 0
    %414 = vmatpush2.bf16.msra.mxu0 0
    %415 = vmatprep.subr.bf16.mxu0 0
    %416 = vmatpush2.bf16.msra.mxu0 0
    %417 = vmatprep.subr.bf16.mxu0 0
    %418 = vmatpush2.bf16.msra.mxu0 0
    %419 = vmatprep.subr.bf16.mxu0 0
    %420 = vmatpush2.bf16.msra.mxu0 0
    %421 = vmatprep.subr.bf16.mxu0 0
    %422 = vmatpush2.bf16.msra.mxu0 0
    %423 = vmatprep.subr.bf16.mxu0 0
    %424 = vmatpush2.bf16.msra.mxu0 0
    %425 = vmatprep.mubr.bf16.mxu0 0
    %426 = vmatmul.mubr.bf16.gmra.mxu0 %v321
    %v427 = vpop.f32.mrf.mxu0
    %v428 = vadd.f32 0.0, %v427
    %v429 = vpop.f32.mrf.mxu0
    %v430 = vpop.f32.mrf.mxu0
    %v431 = vadd.f32 0.0, %v430
    %v432 = vpop.f32.mrf.mxu0
    %433 = vmatprep.mubr.bf16.mxu0 0
    %434 = vmatmul.mubr.bf16.gmra.mxu0 %v322
    %v435 = vpop.f32.mrf.mxu0
    %v436 = vadd.f32 0.0, %v435
    %v437 = vpop.f32.mrf.mxu0
    %v438 = vpop.f32.mrf.mxu0
    %v439 = vadd.f32 0.0, %v438
    %v440 = vpop.f32.mrf.mxu0
    %441 = vmatprep.mubr.bf16.mxu0 0
    %442 = vmatmul.mubr.bf16.gmra.mxu0 %v323
    %v443 = vpop.f32.mrf.mxu0
    %v444 = vadd.f32 0.0, %v443
    %v445 = vpop.f32.mrf.mxu0
    %v446 = vpop.f32.mrf.mxu0
    %v447 = vadd.f32 0.0, %v446
    %v448 = vpop.f32.mrf.mxu0
    %449 = vmatprep.mubr.bf16.mxu0 0
    %450 = vmatmul.mubr.bf16.gmra.mxu0 %v324
    %v451 = vpop.f32.mrf.mxu0
    %v452 = vadd.f32 0.0, %v451
    %v453 = vpop.f32.mrf.mxu0
    %v454 = vpop.f32.mrf.mxu0
    %v455 = vadd.f32 0.0, %v454
    %v456 = vpop.f32.mrf.mxu0
    %457 = vmatprep.mubr.bf16.mxu0 0
    %458 = vmatmul.mubr.bf16.gmra.mxu0 %v325
    %v459 = vpop.f32.mrf.mxu0
    %v460 = vadd.f32 0.0, %v459
    %v461 = vpop.f32.mrf.mxu0
    %v462 = vpop.f32.mrf.mxu0
    %v463 = vadd.f32 0.0, %v462
    %v464 = vpop.f32.mrf.mxu0
    %465 = vmatprep.mubr.bf16.mxu0 0
    %466 = vmatmul.mubr.bf16.gmra.mxu0 %v326
    %v467 = vpop.f32.mrf.mxu0
    %v468 = vadd.f32 0.0, %v467
    %v469 = vpop.f32.mrf.mxu0
    %v470 = vpop.f32.mrf.mxu0
    %v471 = vadd.f32 0.0, %v470
    %v472 = vpop.f32.mrf.mxu0
    %473 = vmatprep.mubr.bf16.mxu0 0
    %474 = vmatmul.mubr.bf16.gmra.mxu0 %v327
    %v475 = vpop.f32.mrf.mxu0
    %v476 = vadd.f32 0.0, %v475
    %v477 = vpop.f32.mrf.mxu0
    %v478 = vpop.f32.mrf.mxu0
    %v479 = vadd.f32 0.0, %v478
    %v480 = vpop.f32.mrf.mxu0
    %481 = vmatprep.mubr.bf16.mxu0 0
    %482 = vmatmul.mubr.bf16.gmra.mxu0 %v328
    %v483 = vpop.f32.mrf.mxu0
    %v484 = vadd.f32 0.0, %v483
    %v485 = vpop.f32.mrf.mxu0
    %v486 = vpop.f32.mrf.mxu0
    %v487 = vadd.f32 0.0, %v486
    %v488 = vpop.f32.mrf.mxu0
    %489 = vdwg.mxu0
    %v490 = vpack.c.bf16 %v431, %v428
    %v491 = vpack.c.bf16 %v439, %v436
    %v492 = vpack.c.bf16 %v447, %v444
    %v493 = vpack.c.bf16 %v455, %v452
    %v494 = vpack.c.bf16 %v463, %v460
    %v495 = vpack.c.bf16 %v471, %v468
    %v496 = vpack.c.bf16 %v479, %v476
    %v497 = vpack.c.bf16 %v487, %v484
    %498 = vmatprep.subr.bf16.mxu0 0
    %499 = vmatpush1.bf16.msra.mxu0 %v497
    %500 = vmatprep.subr.bf16.mxu0 0
    %501 = vmatpush1.bf16.msra.mxu0 %v496
    %502 = vmatprep.subr.bf16.mxu0 0
    %503 = vmatpush1.bf16.msra.mxu0 %v495
    %504 = vmatprep.subr.bf16.mxu0 0
    %505 = vmatpush1.bf16.msra.mxu0 %v494
    %506 = vmatprep.subr.bf16.mxu0 0
    %507 = vmatpush1.bf16.msra.mxu0 %v493
    %508 = vmatprep.subr.bf16.mxu0 0
    %509 = vmatpush1.bf16.msra.mxu0 %v492
    %510 = vmatprep.subr.bf16.mxu0 0
    %511 = vmatpush1.bf16.msra.mxu0 %v491
    %512 = vmatprep.subr.bf16.mxu0 0
    %513 = vmatpush1.bf16.msra.mxu0 %v490
    %514 = vmatprep.subr.bf16.mxu0 0
    %515 = vmatpush2.bf16.msra.mxu0 0
    %516 = vmatprep.subr.bf16.mxu0 0
    %517 = vmatpush2.bf16.msra.mxu0 0
    %518 = vmatprep.subr.bf16.mxu0 0
    %519 = vmatpush2.bf16.msra.mxu0 0
    %520 = vmatprep.subr.bf16.mxu0 0
    %521 = vmatpush2.bf16.msra.mxu0 0
    %522 = vmatprep.subr.bf16.mxu0 0
    %523 = vmatpush2.bf16.msra.mxu0 0
    %524 = vmatprep.subr.bf16.mxu0 0
    %525 = vmatpush2.bf16.msra.mxu0 0
    %526 = vmatprep.subr.bf16.mxu0 0
    %527 = vmatpush2.bf16.msra.mxu0 0
    %528 = vmatprep.subr.bf16.mxu0 0
    %529 = vmatpush2.bf16.msra.mxu0 0
    %530 = vmatprep.mubr.bf16.mxu0 0
    %531 = vmatmul.mubr.bf16.gmra.mxu0 %v152
    %v532 = vpop.f32.mrf.mxu0
    %v533 = vadd.f32 0.0, %v532
    %v534 = vpop.f32.mrf.mxu0
    %v535 = vpop.f32.mrf.mxu0
    %v536 = vadd.f32 0.0, %v535
    %v537 = vpop.f32.mrf.mxu0
    %538 = vmatprep.mubr.bf16.mxu0 0
    %539 = vmatmul.mubr.bf16.gmra.mxu0 %v153
    %v540 = vpop.f32.mrf.mxu0
    %v541 = vadd.f32 0.0, %v540
    %v542 = vpop.f32.mrf.mxu0
    %v543 = vpop.f32.mrf.mxu0
    %v544 = vadd.f32 0.0, %v543
    %v545 = vpop.f32.mrf.mxu0
    %546 = vmatprep.mubr.bf16.mxu0 0
    %547 = vmatmul.mubr.bf16.gmra.mxu0 %v154
    %v548 = vpop.f32.mrf.mxu0
    %v549 = vadd.f32 0.0, %v548
    %v550 = vpop.f32.mrf.mxu0
    %v551 = vpop.f32.mrf.mxu0
    %v552 = vadd.f32 0.0, %v551
    %v553 = vpop.f32.mrf.mxu0
    %554 = vmatprep.mubr.bf16.mxu0 0
    %555 = vmatmul.mubr.bf16.gmra.mxu0 %v155
    %v556 = vpop.f32.mrf.mxu0
    %v557 = vadd.f32 0.0, %v556
    %v558 = vpop.f32.mrf.mxu0
    %v559 = vpop.f32.mrf.mxu0
    %v560 = vadd.f32 0.0, %v559
    %v561 = vpop.f32.mrf.mxu0
    %562 = vmatprep.mubr.bf16.mxu0 0
    %563 = vmatmul.mubr.bf16.gmra.mxu0 %v156
    %v564 = vpop.f32.mrf.mxu0
    %v565 = vadd.f32 0.0, %v564
    %v566 = vpop.f32.mrf.mxu0
    %v567 = vpop.f32.mrf.mxu0
    %v568 = vadd.f32 0.0, %v567
    %v569 = vpop.f32.mrf.mxu0
    %570 = vmatprep.mubr.bf16.mxu0 0
    %571 = vmatmul.mubr.bf16.gmra.mxu0 %v157
    %v572 = vpop.f32.mrf.mxu0
    %v573 = vadd.f32 0.0, %v572
    %v574 = vpop.f32.mrf.mxu0
    %v575 = vpop.f32.mrf.mxu0
    %v576 = vadd.f32 0.0, %v575
    %v577 = vpop.f32.mrf.mxu0
    %578 = vmatprep.mubr.bf16.mxu0 0
    %579 = vmatmul.mubr.bf16.gmra.mxu0 %v158
    %v580 = vpop.f32.mrf.mxu0
    %v581 = vadd.f32 0.0, %v580
    %v582 = vpop.f32.mrf.mxu0
    %v583 = vpop.f32.mrf.mxu0
    %v584 = vadd.f32 0.0, %v583
    %v585 = vpop.f32.mrf.mxu0
    %586 = vmatprep.mubr.bf16.mxu0 0
    %587 = vmatmul.mubr.bf16.gmra.mxu0 %v159
    %v588 = vpop.f32.mrf.mxu0
    %v589 = vadd.f32 0.0, %v588
    %v590 = vpop.f32.mrf.mxu0
    %v591 = vpop.f32.mrf.mxu0
    %v592 = vadd.f32 0.0, %v591
    %v593 = vpop.f32.mrf.mxu0
    %594 = vdwg.mxu0
    %v595 = vpack.c.bf16 %v536, %v533
    %v596 = vpack.c.bf16 %v544, %v541
    %v597 = vpack.c.bf16 %v552, %v549
    %v598 = vpack.c.bf16 %v560, %v557
    %v599 = vpack.c.bf16 %v568, %v565
    %v600 = vpack.c.bf16 %v576, %v573
    %v601 = vpack.c.bf16 %v584, %v581
    %v602 = vpack.c.bf16 %v592, %v589
    %v603 = vmax.bf16 %v595, 0
    %v604 = vmax.bf16 %v596, 0
    %v605 = vmax.bf16 %v597, 0
    %v606 = vmax.bf16 %v598, 0
    %v607 = vmax.bf16 %v599, 0
    %v608 = vmax.bf16 %v600, 0
    %v609 = vmax.bf16 %v601, 0
    %v610 = vmax.bf16 %v602, 0
    %s611 = scalar_lea.vmem [#allocation8], 64
    %v612 = vld [vmem:[%s611] sm:$0xf]
    %v613 = vld [vmem:[%s611 + $0x4] sm:$0xf]
    %v614 = vld [vmem:[%s611 + $0x8] sm:$0xf]
    %v615 = vld [vmem:[%s611 + $0xc] sm:$0xf]
    %v616 = vld [vmem:[%s611 + $0x10] sm:$0xf]
    %v617 = vld [vmem:[%s611 + $0x14] sm:$0xf]
    %v618 = vld [vmem:[%s611 + $0x18] sm:$0xf]
    %v619 = vld [vmem:[%s611 + $0x1c] sm:$0xf]
    %v620 = vld [vmem:[%s611 + $0x20] sm:$0xf]
    %v621 = vld [vmem:[%s611 + $0x24] sm:$0xf]
    %v622 = vld [vmem:[%s611 + $0x28] sm:$0xf]
    %v623 = vld [vmem:[%s611 + $0x2c] sm:$0xf]
    %v624 = vld [vmem:[%s611 + $0x30] sm:$0xf]
    %v625 = vld [vmem:[%s611 + $0x34] sm:$0xf]
    %v626 = vld [vmem:[%s611 + $0x38] sm:$0xf]
    %v627 = vld [vmem:[%s611 + $0x3c] sm:$0xf]
    %v644 = vunpack.c.l.b16 %v612
    %v645 = vunpack.c.l.b16 %v613
    %v646 = vunpack.c.l.b16 %v614
    %v647 = vunpack.c.l.b16 %v615
    %v648 = vunpack.c.l.b16 %v616
    %v649 = vunpack.c.l.b16 %v617
    %v650 = vunpack.c.l.b16 %v618
    %v651 = vunpack.c.l.b16 %v619
    %v652 = vunpack.c.l.b16 %v620
    %v653 = vunpack.c.l.b16 %v621
    %v654 = vunpack.c.l.b16 %v622
    %v655 = vunpack.c.l.b16 %v623
    %v656 = vunpack.c.l.b16 %v624
    %v657 = vunpack.c.l.b16 %v625
    %v658 = vunpack.c.l.b16 %v626
    %v659 = vunpack.c.l.b16 %v627
    %v660 = vpack.c.b16 %v645, %v644
    %v661 = vpack.c.b16 %v647, %v646
    %v662 = vpack.c.b16 %v649, %v648
    %v663 = vpack.c.b16 %v651, %v650
    %v664 = vpack.c.b16 %v653, %v652
    %v665 = vpack.c.b16 %v655, %v654
    %v666 = vpack.c.b16 %v657, %v656
    %v667 = vpack.c.b16 %v659, %v658
    %676 = vmatprep.subr.bf16.mxu0 0
    %677 = vmatpush1.bf16.msra.mxu0 %v667
    %678 = vmatprep.subr.bf16.mxu0 0
    %679 = vmatpush1.bf16.msra.mxu0 %v666
    %680 = vmatprep.subr.bf16.mxu0 0
    %681 = vmatpush1.bf16.msra.mxu0 %v665
    %682 = vmatprep.subr.bf16.mxu0 0
    %683 = vmatpush1.bf16.msra.mxu0 %v664
    %684 = vmatprep.subr.bf16.mxu0 0
    %685 = vmatpush1.bf16.msra.mxu0 %v663
    %686 = vmatprep.subr.bf16.mxu0 0
    %687 = vmatpush1.bf16.msra.mxu0 %v662
    %688 = vmatprep.subr.bf16.mxu0 0
    %689 = vmatpush1.bf16.msra.mxu0 %v661
    %690 = vmatprep.subr.bf16.mxu0 0
    %691 = vmatpush1.bf16.msra.mxu0 %v660
    %692 = vmatprep.subr.bf16.mxu0 0
    %693 = vmatpush2.bf16.msra.mxu0 0
    %694 = vmatprep.subr.bf16.mxu0 0
    %695 = vmatpush2.bf16.msra.mxu0 0
    %696 = vmatprep.subr.bf16.mxu0 0
    %697 = vmatpush2.bf16.msra.mxu0 0
    %698 = vmatprep.subr.bf16.mxu0 0
    %699 = vmatpush2.bf16.msra.mxu0 0
    %700 = vmatprep.subr.bf16.mxu0 0
    %701 = vmatpush2.bf16.msra.mxu0 0
    %702 = vmatprep.subr.bf16.mxu0 0
    %703 = vmatpush2.bf16.msra.mxu0 0
    %704 = vmatprep.subr.bf16.mxu0 0
    %705 = vmatpush2.bf16.msra.mxu0 0
    %706 = vmatprep.subr.bf16.mxu0 0
    %707 = vmatpush2.bf16.msra.mxu0 0
    %708 = vmatprep.mubr.bf16.mxu0 0
    %709 = vmatmul.mubr.bf16.gmra.mxu0 %v603
    %v710 = vpop.f32.mrf.mxu0
    %v711 = vadd.f32 0.0, %v710
    %v712 = vpop.f32.mrf.mxu0
    %v713 = vpop.f32.mrf.mxu0
    %v714 = vadd.f32 0.0, %v713
    %v715 = vpop.f32.mrf.mxu0
    %716 = vmatprep.mubr.bf16.mxu0 0
    %717 = vmatmul.mubr.bf16.gmra.mxu0 %v604
    %v718 = vpop.f32.mrf.mxu0
    %v719 = vadd.f32 0.0, %v718
    %v720 = vpop.f32.mrf.mxu0
    %v721 = vpop.f32.mrf.mxu0
    %v722 = vadd.f32 0.0, %v721
    %v723 = vpop.f32.mrf.mxu0
    %724 = vmatprep.mubr.bf16.mxu0 0
    %725 = vmatmul.mubr.bf16.gmra.mxu0 %v605
    %v726 = vpop.f32.mrf.mxu0
    %v727 = vadd.f32 0.0, %v726
    %v728 = vpop.f32.mrf.mxu0
    %v729 = vpop.f32.mrf.mxu0
    %v730 = vadd.f32 0.0, %v729
    %v731 = vpop.f32.mrf.mxu0
    %732 = vmatprep.mubr.bf16.mxu0 0
    %733 = vmatmul.mubr.bf16.gmra.mxu0 %v606
    %v734 = vpop.f32.mrf.mxu0
    %v735 = vadd.f32 0.0, %v734
    %v736 = vpop.f32.mrf.mxu0
    %v737 = vpop.f32.mrf.mxu0
    %v738 = vadd.f32 0.0, %v737
    %v739 = vpop.f32.mrf.mxu0
    %740 = vmatprep.mubr.bf16.mxu0 0
    %741 = vmatmul.mubr.bf16.gmra.mxu0 %v607
    %v742 = vpop.f32.mrf.mxu0
    %v743 = vadd.f32 0.0, %v742
    %v744 = vpop.f32.mrf.mxu0
    %v745 = vpop.f32.mrf.mxu0
    %v746 = vadd.f32 0.0, %v745
    %v747 = vpop.f32.mrf.mxu0
    %748 = vmatprep.mubr.bf16.mxu0 0
    %749 = vmatmul.mubr.bf16.gmra.mxu0 %v608
    %v750 = vpop.f32.mrf.mxu0
    %v751 = vadd.f32 0.0, %v750
    %v752 = vpop.f32.mrf.mxu0
    %v753 = vpop.f32.mrf.mxu0
    %v754 = vadd.f32 0.0, %v753
    %v755 = vpop.f32.mrf.mxu0
    %756 = vmatprep.mubr.bf16.mxu0 0
    %757 = vmatmul.mubr.bf16.gmra.mxu0 %v609
    %v758 = vpop.f32.mrf.mxu0
    %v759 = vadd.f32 0.0, %v758
    %v760 = vpop.f32.mrf.mxu0
    %v761 = vpop.f32.mrf.mxu0
    %v762 = vadd.f32 0.0, %v761
    %v763 = vpop.f32.mrf.mxu0
    %764 = vmatprep.mubr.bf16.mxu0 0
    %765 = vmatmul.mubr.bf16.gmra.mxu0 %v610
    %v766 = vpop.f32.mrf.mxu0
    %v767 = vadd.f32 0.0, %v766
    %v768 = vpop.f32.mrf.mxu0
    %v769 = vpop.f32.mrf.mxu0
    %v770 = vadd.f32 0.0, %v769
    %v771 = vpop.f32.mrf.mxu0
    %772 = vdwg.mxu0
    %v773 = vpack.c.bf16 %v714, %v711
    %v774 = vpack.c.bf16 %v722, %v719
    %v775 = vpack.c.bf16 %v730, %v727
    %v776 = vpack.c.bf16 %v738, %v735
    %v777 = vpack.c.bf16 %v746, %v743
    %v778 = vpack.c.bf16 %v754, %v751
    %v779 = vpack.c.bf16 %v762, %v759
    %v780 = vpack.c.bf16 %v770, %v767
    %781 = vmatprep.subr.bf16.mxu0 0
    %782 = vmatpush1.bf16.msra.mxu0 %v780
    %783 = vmatprep.subr.bf16.mxu0 0
    %784 = vmatpush1.bf16.msra.mxu0 %v779
    %785 = vmatprep.subr.bf16.mxu0 0
    %786 = vmatpush1.bf16.msra.mxu0 %v778
    %787 = vmatprep.subr.bf16.mxu0 0
    %788 = vmatpush1.bf16.msra.mxu0 %v777
    %789 = vmatprep.subr.bf16.mxu0 0
    %790 = vmatpush1.bf16.msra.mxu0 %v776
    %791 = vmatprep.subr.bf16.mxu0 0
    %792 = vmatpush1.bf16.msra.mxu0 %v775
    %793 = vmatprep.subr.bf16.mxu0 0
    %794 = vmatpush1.bf16.msra.mxu0 %v774
    %795 = vmatprep.subr.bf16.mxu0 0
    %796 = vmatpush1.bf16.msra.mxu0 %v773
    %797 = vmatprep.subr.bf16.mxu0 0
    %798 = vmatpush2.bf16.msra.mxu0 0
    %799 = vmatprep.subr.bf16.mxu0 0
    %800 = vmatpush2.bf16.msra.mxu0 0
    %801 = vmatprep.subr.bf16.mxu0 0
    %802 = vmatpush2.bf16.msra.mxu0 0
    %803 = vmatprep.subr.bf16.mxu0 0
    %804 = vmatpush2.bf16.msra.mxu0 0
    %805 = vmatprep.subr.bf16.mxu0 0
    %806 = vmatpush2.bf16.msra.mxu0 0
    %807 = vmatprep.subr.bf16.mxu0 0
    %808 = vmatpush2.bf16.msra.mxu0 0
    %809 = vmatprep.subr.bf16.mxu0 0
    %810 = vmatpush2.bf16.msra.mxu0 0
    %811 = vmatprep.subr.bf16.mxu0 0
    %812 = vmatpush2.bf16.msra.mxu0 0
    %813 = vmatprep.mubr.bf16.mxu0 0
    %814 = vmatmul.mubr.bf16.gmra.mxu0 %v152
    %v815 = vpop.f32.mrf.mxu0
    %v816 = vadd.f32 0.0, %v815
    %v817 = vpop.f32.mrf.mxu0
    %v818 = vpop.f32.mrf.mxu0
    %v819 = vadd.f32 0.0, %v818
    %v820 = vpop.f32.mrf.mxu0
    %821 = vmatprep.mubr.bf16.mxu0 0
    %822 = vmatmul.mubr.bf16.gmra.mxu0 %v153
    %v823 = vpop.f32.mrf.mxu0
    %v824 = vadd.f32 0.0, %v823
    %v825 = vpop.f32.mrf.mxu0
    %v826 = vpop.f32.mrf.mxu0
    %v827 = vadd.f32 0.0, %v826
    %v828 = vpop.f32.mrf.mxu0
    %829 = vmatprep.mubr.bf16.mxu0 0
    %830 = vmatmul.mubr.bf16.gmra.mxu0 %v154
    %v831 = vpop.f32.mrf.mxu0
    %v832 = vadd.f32 0.0, %v831
    %v833 = vpop.f32.mrf.mxu0
    %v834 = vpop.f32.mrf.mxu0
    %v835 = vadd.f32 0.0, %v834
    %v836 = vpop.f32.mrf.mxu0
    %837 = vmatprep.mubr.bf16.mxu0 0
    %838 = vmatmul.mubr.bf16.gmra.mxu0 %v155
    %v839 = vpop.f32.mrf.mxu0
    %v840 = vadd.f32 0.0, %v839
    %v841 = vpop.f32.mrf.mxu0
    %v842 = vpop.f32.mrf.mxu0
    %v843 = vadd.f32 0.0, %v842
    %v844 = vpop.f32.mrf.mxu0
    %845 = vmatprep.mubr.bf16.mxu0 0
    %846 = vmatmul.mubr.bf16.gmra.mxu0 %v156
    %v847 = vpop.f32.mrf.mxu0
    %v848 = vadd.f32 0.0, %v847
    %v849 = vpop.f32.mrf.mxu0
    %v850 = vpop.f32.mrf.mxu0
    %v851 = vadd.f32 0.0, %v850
    %v852 = vpop.f32.mrf.mxu0
    %853 = vmatprep.mubr.bf16.mxu0 0
    %854 = vmatmul.mubr.bf16.gmra.mxu0 %v157
    %v855 = vpop.f32.mrf.mxu0
    %v856 = vadd.f32 0.0, %v855
    %v857 = vpop.f32.mrf.mxu0
    %v858 = vpop.f32.mrf.mxu0
    %v859 = vadd.f32 0.0, %v858
    %v860 = vpop.f32.mrf.mxu0
    %861 = vmatprep.mubr.bf16.mxu0 0
    %862 = vmatmul.mubr.bf16.gmra.mxu0 %v158
    %v863 = vpop.f32.mrf.mxu0
    %v864 = vadd.f32 0.0, %v863
    %v865 = vpop.f32.mrf.mxu0
    %v866 = vpop.f32.mrf.mxu0
    %v867 = vadd.f32 0.0, %v866
    %v868 = vpop.f32.mrf.mxu0
    %869 = vmatprep.mubr.bf16.mxu0 0
    %870 = vmatmul.mubr.bf16.gmra.mxu0 %v159
    %v871 = vpop.f32.mrf.mxu0
    %v872 = vadd.f32 0.0, %v871
    %v873 = vpop.f32.mrf.mxu0
    %v874 = vpop.f32.mrf.mxu0
    %v875 = vadd.f32 0.0, %v874
    %v876 = vpop.f32.mrf.mxu0
    %877 = vdwg.mxu0
    %v878 = vpack.c.bf16 %v819, %v816
    %v879 = vpack.c.bf16 %v827, %v824
    %v880 = vpack.c.bf16 %v835, %v832
    %v881 = vpack.c.bf16 %v843, %v840
    %v882 = vpack.c.bf16 %v851, %v848
    %v883 = vpack.c.bf16 %v859, %v856
    %v884 = vpack.c.bf16 %v867, %v864
    %v885 = vpack.c.bf16 %v875, %v872
    %v886 = vmax.bf16 %v878, 0
    %v887 = vmax.bf16 %v879, 0
    %v888 = vmax.bf16 %v880, 0
    %v889 = vmax.bf16 %v881, 0
    %v890 = vmax.bf16 %v882, 0
    %v891 = vmax.bf16 %v883, 0
    %v892 = vmax.bf16 %v884, 0
    %v893 = vmax.bf16 %v885, 0
    %v894 = vld [vmem:[#allocation7] sm:$0xf]
    %v895 = vld [vmem:[#allocation7 + $0x4] sm:$0xf]
    %v898 = vunpack.c.l.b16 %v894
    %v899 = vunpack.c.l.b16 %v895
    %v900 = vpack.c.b16 %v899, %v898
    %902 = vmatprep.subr.bf16.mxu0 0
    %903 = vmatpush1.bf16.msra.mxu0 %v893
    %904 = vmatprep.subr.bf16.mxu0 0
    %905 = vmatpush1.bf16.msra.mxu0 %v892
    %906 = vmatprep.subr.bf16.mxu0 0
    %907 = vmatpush1.bf16.msra.mxu0 %v891
    %908 = vmatprep.subr.bf16.mxu0 0
    %909 = vmatpush1.bf16.msra.mxu0 %v890
    %910 = vmatprep.subr.bf16.mxu0 0
    %911 = vmatpush1.bf16.msra.mxu0 %v889
    %912 = vmatprep.subr.bf16.mxu0 0
    %913 = vmatpush1.bf16.msra.mxu0 %v888
    %914 = vmatprep.subr.bf16.mxu0 0
    %915 = vmatpush1.bf16.msra.mxu0 %v887
    %916 = vmatprep.subr.bf16.mxu0 0
    %917 = vmatpush1.bf16.msra.mxu0 %v886
    %918 = vmatprep.subr.bf16.mxu0 0
    %919 = vmatpush2.bf16.msra.mxu0 0
    %920 = vmatprep.subr.bf16.mxu0 0
    %921 = vmatpush2.bf16.msra.mxu0 0
    %922 = vmatprep.subr.bf16.mxu0 0
    %923 = vmatpush2.bf16.msra.mxu0 0
    %924 = vmatprep.subr.bf16.mxu0 0
    %925 = vmatpush2.bf16.msra.mxu0 0
    %926 = vmatprep.subr.bf16.mxu0 0
    %927 = vmatpush2.bf16.msra.mxu0 0
    %928 = vmatprep.subr.bf16.mxu0 0
    %929 = vmatpush2.bf16.msra.mxu0 0
    %930 = vmatprep.subr.bf16.mxu0 0
    %931 = vmatpush2.bf16.msra.mxu0 0
    %932 = vmatprep.subr.bf16.mxu0 0
    %933 = vmatpush2.bf16.msra.mxu0 0
    %934 = vmatprep.mubr.bf16.mxu0 0
    %935 = vmatmul.mubr.bf16.gmra.mxu0 %v900
    %v936 = vpop.f32.mrf.mxu0
    %v937 = vadd.f32 0.0, %v936
    %v938 = vpop.f32.mrf.mxu0
    %v939 = vpop.f32.mrf.mxu0
    %v940 = vadd.f32 0.0, %v939
    %v941 = vpop.f32.mrf.mxu0
    %942 = vdwg.mxu0
    %v943 = vpack.c.bf16 %v940, %v937
    %s944 = scalar_lea.vmem [#allocation8], 128
    %v945 = vld [vmem:[%s944] sm:$0xf]
    %v946 = vld [vmem:[%s944 + $0x4] sm:$0xf]
    %v947 = vld [vmem:[%s944 + $0x8] sm:$0xf]
    %v948 = vld [vmem:[%s944 + $0xc] sm:$0xf]
    %v949 = vld [vmem:[%s944 + $0x10] sm:$0xf]
    %v950 = vld [vmem:[%s944 + $0x14] sm:$0xf]
    %v951 = vld [vmem:[%s944 + $0x18] sm:$0xf]
    %v952 = vld [vmem:[%s944 + $0x1c] sm:$0xf]
    %v953 = vld [vmem:[%s944 + $0x20] sm:$0xf]
    %v954 = vld [vmem:[%s944 + $0x24] sm:$0xf]
    %v955 = vld [vmem:[%s944 + $0x28] sm:$0xf]
    %v956 = vld [vmem:[%s944 + $0x2c] sm:$0xf]
    %v957 = vld [vmem:[%s944 + $0x30] sm:$0xf]
    %v958 = vld [vmem:[%s944 + $0x34] sm:$0xf]
    %v959 = vld [vmem:[%s944 + $0x38] sm:$0xf]
    %v960 = vld [vmem:[%s944 + $0x3c] sm:$0xf]
    %v961 = vld [vmem:[#allocation10] sm:$0x1]
    %v962 = vlaneseq
    %v963 = vshrl.u32 %v962, 7
    %v964 = vsub.s32 0, %v963
    %v965 = vrot.slane %v961, %v964
    %v982 = vunpack.c.l.b16 %v945
    %v983 = vunpack.c.l.b16 %v946
    %v984 = vunpack.c.l.b16 %v947
    %v985 = vunpack.c.l.b16 %v948
    %v986 = vunpack.c.l.b16 %v949
    %v987 = vunpack.c.l.b16 %v950
    %v988 = vunpack.c.l.b16 %v951
    %v989 = vunpack.c.l.b16 %v952
    %v990 = vunpack.c.l.b16 %v953
    %v991 = vunpack.c.l.b16 %v954
    %v992 = vunpack.c.l.b16 %v955
    %v993 = vunpack.c.l.b16 %v956
    %v994 = vunpack.c.l.b16 %v957
    %v995 = vunpack.c.l.b16 %v958
    %v996 = vunpack.c.l.b16 %v959
    %v997 = vunpack.c.l.b16 %v960
    %v998 = vpack.c.b16 %v983, %v982
    %v999 = vpack.c.b16 %v985, %v984
    %v1000 = vpack.c.b16 %v987, %v986
    %v1001 = vpack.c.b16 %v989, %v988
    %v1002 = vpack.c.b16 %v991, %v990
    %v1003 = vpack.c.b16 %v993, %v992
    %v1004 = vpack.c.b16 %v995, %v994
    %v1005 = vpack.c.b16 %v997, %v996
    %1014 = vmatprep.subr.bf16.mxu0 0
    %1015 = vmatpush1.bf16.msra.mxu0 %v1005
    %1016 = vmatprep.subr.bf16.mxu0 0
    %1017 = vmatpush1.bf16.msra.mxu0 %v1004
    %1018 = vmatprep.subr.bf16.mxu0 0
    %1019 = vmatpush1.bf16.msra.mxu0 %v1003
    %1020 = vmatprep.subr.bf16.mxu0 0
    %1021 = vmatpush1.bf16.msra.mxu0 %v1002
    %1022 = vmatprep.subr.bf16.mxu0 0
    %1023 = vmatpush1.bf16.msra.mxu0 %v1001
    %1024 = vmatprep.subr.bf16.mxu0 0
    %1025 = vmatpush1.bf16.msra.mxu0 %v1000
    %1026 = vmatprep.subr.bf16.mxu0 0
    %1027 = vmatpush1.bf16.msra.mxu0 %v999
    %1028 = vmatprep.subr.bf16.mxu0 0
    %1029 = vmatpush1.bf16.msra.mxu0 %v998
    %1030 = vmatprep.subr.bf16.mxu0 0
    %1031 = vmatpush2.bf16.msra.mxu0 0
    %1032 = vmatprep.subr.bf16.mxu0 0
    %1033 = vmatpush2.bf16.msra.mxu0 0
    %1034 = vmatprep.subr.bf16.mxu0 0
    %1035 = vmatpush2.bf16.msra.mxu0 0
    %1036 = vmatprep.subr.bf16.mxu0 0
    %1037 = vmatpush2.bf16.msra.mxu0 0
    %1038 = vmatprep.subr.bf16.mxu0 0
    %1039 = vmatpush2.bf16.msra.mxu0 0
    %1040 = vmatprep.subr.bf16.mxu0 0
    %1041 = vmatpush2.bf16.msra.mxu0 0
    %1042 = vmatprep.subr.bf16.mxu0 0
    %1043 = vmatpush2.bf16.msra.mxu0 0
    %1044 = vmatprep.subr.bf16.mxu0 0
    %1045 = vmatpush2.bf16.msra.mxu0 0
    %1046 = vmatprep.mubr.bf16.mxu0 0
    %1047 = vmatmul.mubr.bf16.gmra.mxu0 %v943
    %v1048 = vpop.f32.mrf.mxu0
    %v1049 = vadd.f32 %v965, %v1048
    %v1050 = vpop.f32.mrf.mxu0
    %v1051 = vpop.f32.mrf.mxu0
    %v1052 = vadd.f32 %v965, %v1051
    %v1053 = vpop.f32.mrf.mxu0
    %1054 = vdwg.mxu0
    %v1055 = vpack.c.bf16 %v1052, %v1049
    %v1056 = vmax.bf16 %v1055, 0
    %s1057 = scalar_lea.vmem [#allocation8], 192
    %v1058 = vld [vmem:[%s1057] sm:$0xf]
    %v1059 = vld [vmem:[%s1057 + $0x4] sm:$0xf]
    %v1060 = vld [vmem:[%s1057 + $0x8] sm:$0xf]
    %v1061 = vld [vmem:[%s1057 + $0xc] sm:$0xf]
    %v1062 = vld [vmem:[%s1057 + $0x10] sm:$0xf]
    %v1063 = vld [vmem:[%s1057 + $0x14] sm:$0xf]
    %v1064 = vld [vmem:[%s1057 + $0x18] sm:$0xf]
    %v1065 = vld [vmem:[%s1057 + $0x1c] sm:$0xf]
    %v1066 = vld [vmem:[%s1057 + $0x20] sm:$0xf]
    %v1067 = vld [vmem:[%s1057 + $0x24] sm:$0xf]
    %v1068 = vld [vmem:[%s1057 + $0x28] sm:$0xf]
    %v1069 = vld [vmem:[%s1057 + $0x2c] sm:$0xf]
    %v1070 = vld [vmem:[%s1057 + $0x30] sm:$0xf]
    %v1071 = vld [vmem:[%s1057 + $0x34] sm:$0xf]
    %v1072 = vld [vmem:[%s1057 + $0x38] sm:$0xf]
    %v1073 = vld [vmem:[%s1057 + $0x3c] sm:$0xf]
    %v1074 = vld [vmem:[#allocation10 + $0x1] sm:$0x1]
    %v1075 = vlaneseq
    %v1076 = vshrl.u32 %v1075, 7
    %v1077 = vsub.s32 0, %v1076
    %v1078 = vrot.slane %v1074, %v1077
    %v1095 = vunpack.c.l.b16 %v1058
    %v1096 = vunpack.c.l.b16 %v1059
    %v1097 = vunpack.c.l.b16 %v1060
    %v1098 = vunpack.c.l.b16 %v1061
    %v1099 = vunpack.c.l.b16 %v1062
    %v1100 = vunpack.c.l.b16 %v1063
    %v1101 = vunpack.c.l.b16 %v1064
    %v1102 = vunpack.c.l.b16 %v1065
    %v1103 = vunpack.c.l.b16 %v1066
    %v1104 = vunpack.c.l.b16 %v1067
    %v1105 = vunpack.c.l.b16 %v1068
    %v1106 = vunpack.c.l.b16 %v1069
    %v1107 = vunpack.c.l.b16 %v1070
    %v1108 = vunpack.c.l.b16 %v1071
    %v1109 = vunpack.c.l.b16 %v1072
    %v1110 = vunpack.c.l.b16 %v1073
    %v1111 = vpack.c.b16 %v1096, %v1095
    %v1112 = vpack.c.b16 %v1098, %v1097
    %v1113 = vpack.c.b16 %v1100, %v1099
    %v1114 = vpack.c.b16 %v1102, %v1101
    %v1115 = vpack.c.b16 %v1104, %v1103
    %v1116 = vpack.c.b16 %v1106, %v1105
    %v1117 = vpack.c.b16 %v1108, %v1107
    %v1118 = vpack.c.b16 %v1110, %v1109
    %1127 = vmatprep.subr.bf16.mxu0 0
    %1128 = vmatpush1.bf16.msra.mxu0 %v1118
    %1129 = vmatprep.subr.bf16.mxu0 0
    %1130 = vmatpush1.bf16.msra.mxu0 %v1117
    %1131 = vmatprep.subr.bf16.mxu0 0
    %1132 = vmatpush1.bf16.msra.mxu0 %v1116
    %1133 = vmatprep.subr.bf16.mxu0 0
    %1134 = vmatpush1.bf16.msra.mxu0 %v1115
    %1135 = vmatprep.subr.bf16.mxu0 0
    %1136 = vmatpush1.bf16.msra.mxu0 %v1114
    %1137 = vmatprep.subr.bf16.mxu0 0
    %1138 = vmatpush1.bf16.msra.mxu0 %v1113
    %1139 = vmatprep.subr.bf16.mxu0 0
    %1140 = vmatpush1.bf16.msra.mxu0 %v1112
    %1141 = vmatprep.subr.bf16.mxu0 0
    %1142 = vmatpush1.bf16.msra.mxu0 %v1111
    %1143 = vmatprep.subr.bf16.mxu0 0
    %1144 = vmatpush2.bf16.msra.mxu0 0
    %1145 = vmatprep.subr.bf16.mxu0 0
    %1146 = vmatpush2.bf16.msra.mxu0 0
    %1147 = vmatprep.subr.bf16.mxu0 0
    %1148 = vmatpush2.bf16.msra.mxu0 0
    %1149 = vmatprep.subr.bf16.mxu0 0
    %1150 = vmatpush2.bf16.msra.mxu0 0
    %1151 = vmatprep.subr.bf16.mxu0 0
    %1152 = vmatpush2.bf16.msra.mxu0 0
    %1153 = vmatprep.subr.bf16.mxu0 0
    %1154 = vmatpush2.bf16.msra.mxu0 0
    %1155 = vmatprep.subr.bf16.mxu0 0
    %1156 = vmatpush2.bf16.msra.mxu0 0
    %1157 = vmatprep.subr.bf16.mxu0 0
    %1158 = vmatpush2.bf16.msra.mxu0 0
    %1159 = vmatprep.mubr.bf16.mxu0 0
    %1160 = vmatmul.mubr.bf16.gmra.mxu0 %v1056
    %v1161 = vpop.f32.mrf.mxu0
    %v1162 = vadd.f32 %v1078, %v1161
    %v1163 = vpop.f32.mrf.mxu0
    %v1164 = vpop.f32.mrf.mxu0
    %v1165 = vadd.f32 %v1078, %v1164
    %v1166 = vpop.f32.mrf.mxu0
    %1167 = vdwg.mxu0
    %v1168 = vpack.c.bf16 %v1165, %v1162
    %v1169 = vmax.bf16 %v1168, 0
    %s1170 = scalar_lea.vmem [#allocation8], 256
    %v1171 = vld [vmem:[%s1170] sm:$0xf]
    %v1172 = vld [vmem:[%s1170 + $0x4] sm:$0xf]
    %v1173 = vld [vmem:[%s1170 + $0x8] sm:$0xf]
    %v1174 = vld [vmem:[%s1170 + $0xc] sm:$0xf]
    %v1175 = vld [vmem:[%s1170 + $0x10] sm:$0xf]
    %v1176 = vld [vmem:[%s1170 + $0x14] sm:$0xf]
    %v1177 = vld [vmem:[%s1170 + $0x18] sm:$0xf]
    %v1178 = vld [vmem:[%s1170 + $0x1c] sm:$0xf]
    %v1179 = vld [vmem:[%s1170 + $0x20] sm:$0xf]
    %v1180 = vld [vmem:[%s1170 + $0x24] sm:$0xf]
    %v1181 = vld [vmem:[%s1170 + $0x28] sm:$0xf]
    %v1182 = vld [vmem:[%s1170 + $0x2c] sm:$0xf]
    %v1183 = vld [vmem:[%s1170 + $0x30] sm:$0xf]
    %v1184 = vld [vmem:[%s1170 + $0x34] sm:$0xf]
    %v1185 = vld [vmem:[%s1170 + $0x38] sm:$0xf]
    %v1186 = vld [vmem:[%s1170 + $0x3c] sm:$0xf]
    %v1187 = vld [vmem:[#allocation10 + $0x2] sm:$0x1]
    %v1188 = vlaneseq
    %v1189 = vshrl.u32 %v1188, 7
    %v1190 = vsub.s32 0, %v1189
    %v1191 = vrot.slane %v1187, %v1190
    %v1208 = vunpack.c.l.b16 %v1171
    %v1209 = vunpack.c.l.b16 %v1172
    %v1210 = vunpack.c.l.b16 %v1173
    %v1211 = vunpack.c.l.b16 %v1174
    %v1212 = vunpack.c.l.b16 %v1175
    %v1213 = vunpack.c.l.b16 %v1176
    %v1214 = vunpack.c.l.b16 %v1177
    %v1215 = vunpack.c.l.b16 %v1178
    %v1216 = vunpack.c.l.b16 %v1179
    %v1217 = vunpack.c.l.b16 %v1180
    %v1218 = vunpack.c.l.b16 %v1181
    %v1219 = vunpack.c.l.b16 %v1182
    %v1220 = vunpack.c.l.b16 %v1183
    %v1221 = vunpack.c.l.b16 %v1184
    %v1222 = vunpack.c.l.b16 %v1185
    %v1223 = vunpack.c.l.b16 %v1186
    %v1224 = vpack.c.b16 %v1209, %v1208
    %v1225 = vpack.c.b16 %v1211, %v1210
    %v1226 = vpack.c.b16 %v1213, %v1212
    %v1227 = vpack.c.b16 %v1215, %v1214
    %v1228 = vpack.c.b16 %v1217, %v1216
    %v1229 = vpack.c.b16 %v1219, %v1218
    %v1230 = vpack.c.b16 %v1221, %v1220
    %v1231 = vpack.c.b16 %v1223, %v1222
    %1240 = vmatprep.subr.bf16.mxu0 0
    %1241 = vmatpush1.bf16.msra.mxu0 %v1231
    %1242 = vmatprep.subr.bf16.mxu0 0
    %1243 = vmatpush1.bf16.msra.mxu0 %v1230
    %1244 = vmatprep.subr.bf16.mxu0 0
    %1245 = vmatpush1.bf16.msra.mxu0 %v1229
    %1246 = vmatprep.subr.bf16.mxu0 0
    %1247 = vmatpush1.bf16.msra.mxu0 %v1228
    %1248 = vmatprep.subr.bf16.mxu0 0
    %1249 = vmatpush1.bf16.msra.mxu0 %v1227
    %1250 = vmatprep.subr.bf16.mxu0 0
    %1251 = vmatpush1.bf16.msra.mxu0 %v1226
    %1252 = vmatprep.subr.bf16.mxu0 0
    %1253 = vmatpush1.bf16.msra.mxu0 %v1225
    %1254 = vmatprep.subr.bf16.mxu0 0
    %1255 = vmatpush1.bf16.msra.mxu0 %v1224
    %1256 = vmatprep.subr.bf16.mxu0 0
    %1257 = vmatpush2.bf16.msra.mxu0 0
    %1258 = vmatprep.subr.bf16.mxu0 0
    %1259 = vmatpush2.bf16.msra.mxu0 0
    %1260 = vmatprep.subr.bf16.mxu0 0
    %1261 = vmatpush2.bf16.msra.mxu0 0
    %1262 = vmatprep.subr.bf16.mxu0 0
    %1263 = vmatpush2.bf16.msra.mxu0 0
    %1264 = vmatprep.subr.bf16.mxu0 0
    %1265 = vmatpush2.bf16.msra.mxu0 0
    %1266 = vmatprep.subr.bf16.mxu0 0
    %1267 = vmatpush2.bf16.msra.mxu0 0
    %1268 = vmatprep.subr.bf16.mxu0 0
    %1269 = vmatpush2.bf16.msra.mxu0 0
    %1270 = vmatprep.subr.bf16.mxu0 0
    %1271 = vmatpush2.bf16.msra.mxu0 0
    %1272 = vmatprep.mubr.bf16.mxu0 0
    %1273 = vmatmul.mubr.bf16.gmra.mxu0 %v1169
    %v1274 = vpop.f32.mrf.mxu0
    %v1275 = vadd.f32 %v1191, %v1274
    %v1276 = vpop.f32.mrf.mxu0
    %v1277 = vpop.f32.mrf.mxu0
    %v1278 = vadd.f32 %v1191, %v1277
    %v1279 = vpop.f32.mrf.mxu0
    %1280 = vdwg.mxu0
    %1281 = vst [vmem:[#allocation11] sm:$0xff] %v1275
    %1282 = vst [vmem:[#allocation11 + $0x8] sm:$0xff] %v1278
    // Predicated region
    $region42: #{tpu_custom_call.1} parent=1 // pred_check
      _
    $region43: #{tpu_custom_call.1} parent=1 // pred_check_branch
      %1284 = sbr.rel (0) target = $region45
    $region44: #{tpu_custom_call.1} parent=1 // pred_region
      %s1286 = ssub.s32 256, 256
      %1287 = vsyncadd [#allocation4], %s1286
      %s1288 = sshll.u32 [#allocation11], 4
      %s1289 = int_to_ptr.vmem [resolvable:$true] %s1288
      %1294 = dma.vmem_to_hbm [thread:$0]  %s1289, 256, %s5, [#allocation4], 128, 128, 8
    $region45: #{tpu_custom_call.1} parent=1 // pred_fallthru
      _
    // Predicated region
    $region46: #{tpu_custom_call.1} parent=1 // pred_check
      _
    $region47: #{tpu_custom_call.1} parent=1 // pred_check_branch
      %1296 = sbr.rel (0) target = $region49
    $region48: #{tpu_custom_call.1} parent=1 // pred_region
      %1297 = dma.done [#allocation4], 256
    $region49: #{tpu_custom_call.1} parent=1 // pred_fallthru
      _
    %1298 = vsyncpa [#allocation3], 1
    %1299 = vsyncpa [#allocation6], 1
    %1300 = vsyncpa [#allocation9], 1
    %1301 = vsyncpa [#allocation4], 1

</llo_original>
